<compile_context>
chip_gen: v7x
topology: tpu7x:2x2x1
jax: 0.10.0
libtpu: 0.0.40
codegen_flags: <defaults>
</compile_context>

<pallas_src>
import functools
import math

import numpy as np
import jax
import jax.numpy as jnp
from jax.experimental import pallas as pl
from jax.experimental.pallas import tpu as pltpu


# ----------------------------------------------------------------------------
# Host-side construction of the (composed) linear-operator matrices.
# ----------------------------------------------------------------------------
def _bilinear_resize_matrix(out_size: int, in_size: int) -> np.ndarray:
    """PyTorch/Kornia bilinear resize, align_corners=False, as a matrix."""
    out_idx = np.arange(out_size, dtype=np.float64)
    src = (out_idx + 0.5) * (in_size / out_size) - 0.5
    src = np.maximum(src, 0.0)
    i0 = np.minimum(np.floor(src).astype(np.int64), in_size - 1)
    i1 = np.minimum(i0 + 1, in_size - 1)
    lam = (src - i0).astype(np.float32)
    eye = np.eye(in_size, dtype=np.float32)
    return (1.0 - lam)[:, None] * eye[i0] + lam[:, None] * eye[i1]


def _crop_resize_matrices(out_size: int, in_size: int,
                          start: np.ndarray, length: np.ndarray) -> np.ndarray:
    """Vectorized bilinear crop-and-resize matrices, one per sample: (B, out, in)."""
    out_idx = np.arange(out_size, dtype=np.float64)
    if out_size > 1:
        src = start[:, None] + out_idx[None, :] * (length[:, None] - 1.0) / (out_size - 1.0)
    else:
        src = start[:, None] + (length[:, None] - 1.0) / 2.0 + 0.0 * out_idx[None, :]
    src = np.clip(src, 0.0, in_size - 1.0)
    i0 = np.minimum(np.floor(src).astype(np.int64), in_size - 1)
    i1 = np.minimum(i0 + 1, in_size - 1)
    lam = (src - i0).astype(np.float32)
    eye = np.eye(in_size, dtype=np.float32)
    m = (1.0 - lam)[..., None] * eye[i0] + lam[..., None] * eye[i1]
    return m.astype(np.float32)


def _gaussian_blur_matrix(size: int, ksize: int = 3, sigma: float = 1.5) -> np.ndarray:
    """1-D Gaussian blur (reflect padding) as a band matrix."""
    x = np.arange(ksize, dtype=np.float64) - (ksize - 1) / 2.0
    k = np.exp(-(x ** 2) / (2.0 * sigma ** 2))
    k = k / k.sum()
    m = np.zeros((size, size), dtype=np.float32)
    for i in range(size):
        for t in range(ksize):
            j = i + t - ksize // 2
            if j < 0:
                j = -j
            if j > size - 1:
                j = 2 * (size - 1) - j
            m[i, j] += k[t]
    return m


def _build_composed_operators(B, H_in, W_in, H_t, W_t, rng):
    """Sample augmentation params and compose the full chain into A_h / A_wT."""
    # TODO(synk): Kornia's exact 10-try rejection sampling for RandomResizedCrop and
    # its random_apply bookkeeping are host-side RNG logic, approximated here.
    flips = rng.random(B) < 0.5
    blur_on = bool(rng.random() < 0.1)
    scales = rng.uniform(0.08, 1.0, size=B)
    ratios = np.exp(rng.uniform(math.log(3.0 / 4.0), math.log(4.0 / 3.0), size=B))
    uy = rng.random(B)
    ux = rng.random(B)

    # Shared resize / blur / flip operators.
    rh = _bilinear_resize_matrix(H_t, H_in)                 # (H_t, H_in)
    rwt = _bilinear_resize_matrix(W_t, W_in).T.copy()       # (W_in, W_t)
    if blur_on:
        bh = _gaussian_blur_matrix(H_t)
        bwt = _gaussian_blur_matrix(W_t).T.copy()
    else:
        bh = np.eye(H_t, dtype=np.float32)
        bwt = np.eye(W_t, dtype=np.float32)
    p_flip = np.eye(W_t, dtype=np.float32)[::-1].copy()

    # Per-sample crop boxes (in the resized target space), vectorized.
    target_area = scales * H_t * W_t
    w = np.clip(np.rint(np.sqrt(target_area * ratios)).astype(np.int64), 1, W_t)
    h = np.clip(np.rint(np.sqrt(target_area / ratios)).astype(np.int64), 1, H_t)
    y0 = np.floor(uy * (H_t - h + 1)).astype(np.int64)
    x0 = np.floor(ux * (W_t - w + 1)).astype(np.int64)

    ch = _crop_resize_matrices(H_t, H_t, y0, h)             # (B, H_t, H_t)
    cw = _crop_resize_matrices(W_t, W_t, x0, w)             # (B, W_t, W_t)
    cwt = np.transpose(cw, (0, 2, 1))                       # (B, W_t, W_t)

    # Compose: out = (C_h B_h R_h) x (R_wT [P] B_wT C_wT), pipeline order preserved.
    a_h = np.einsum('bij,jk->bik', ch, bh @ rh).astype(np.float32)      # (B, H_t, H_in)
    base_noflip = rwt @ bwt                                             # (W_in, W_t)
    base_flip = rwt @ p_flip @ bwt                                      # (W_in, W_t)
    base_w = np.where(flips[:, None, None], base_flip[None], base_noflip[None])
    a_wt = np.einsum('bij,bjk->bik', base_w, cwt).astype(np.float32)    # (B, W_in, W_t)
    return a_h, a_wt


# ----------------------------------------------------------------------------
# Pallas kernel: out[b, c] = A_h[b] @ x[b, c] @ A_wT[b]  (2 matmuls per channel
# group: one channel-fused width contraction + C small height contractions).
# ----------------------------------------------------------------------------
def _augment_kernel(x_ref, ah_ref, awt_ref, o_ref, *, bb, num_channels, h_in, h_t):
    for b in range(bb):
        xb = x_ref[b]        # (C*H_in, W_in)  bf16
        ah = ah_ref[b]       # (H_t, H_in)     bf16
        awt = awt_ref[b]     # (W_in, W_t)     bf16
        # Width contraction fused over channels: one MXU matmul, f32 accumulation.
        t = jnp.dot(xb, awt, preferred_element_type=jnp.float32)   # (C*H_in, W_t)
        t = t.astype(jnp.bfloat16)
        for c in range(num_channels):
            tc = t[c * h_in:(c + 1) * h_in, :]                     # (H_in, W_t)
            o_ref[b, c * h_t:(c + 1) * h_t, :] = jnp.dot(
                ah, tc, preferred_element_type=jnp.float32)


def _pick_batch_block(B: int) -> int:
    # Largest divisor block in {8,4,2,1} that still leaves >= 2 grid steps
    # (so both v7x TensorCores get work).
    for bb in (8, 4, 2, 1):
        if B % bb == 0 and (B // bb) >= 2:
            return bb
    return 1


# ----------------------------------------------------------------------------
# Wrapper.
# ----------------------------------------------------------------------------
def simclr_augmentation(x: jax.Array, image_size=(16, 16), seed: int = 0):
    B, C, H_in, W_in = x.shape
    H_t, W_t = image_size

    rng = np.random.default_rng(seed)
    a_h, a_wt = _build_composed_operators(B, H_in, W_in, H_t, W_t, rng)

    # bf16 operands (MXU-friendly), f32 accumulation inside the kernel.
    x_flat = jnp.asarray(x, dtype=jnp.bfloat16).reshape(B, C * H_in, W_in)
    a_h_b = jnp.asarray(a_h, dtype=jnp.bfloat16)      # (B, H_t, H_in)
    a_wt_b = jnp.asarray(a_wt, dtype=jnp.bfloat16)    # (B, W_in, W_t)

    BB = _pick_batch_block(B)
    grid = (B // BB,)

    # Explicit VMEM budget from the per-step footprint (safe on v7x's 64 MiB).
    bytes_in = BB * (C * H_in * W_in + H_t * H_in + W_in * W_t) * 2
    bytes_out = BB * C * H_t * W_t * 4
    vmem_limit = int(min(48 * 1024 * 1024,
                         max(8 * 1024 * 1024, 8 * (bytes_in + bytes_out))))

    kernel = functools.partial(_augment_kernel, bb=BB, num_channels=C,
                               h_in=H_in, h_t=H_t)

    out_flat = pl.pallas_call(
        kernel,
        out_shape=jax.ShapeDtypeStruct((B, C * H_t, W_t), jnp.float32),
        grid_spec=pltpu.PrefetchScalarGridSpec(
            num_scalar_prefetch=0,
            grid=grid,
            in_specs=[
                pl.BlockSpec((BB, C * H_in, W_in), lambda i: (i, 0, 0)),
                pl.BlockSpec((BB, H_t, H_in), lambda i: (i, 0, 0)),
                pl.BlockSpec((BB, W_in, W_t), lambda i: (i, 0, 0)),
            ],
            out_specs=pl.BlockSpec((BB, C * H_t, W_t), lambda i: (i, 0, 0)),
        ),
        compiler_params=pltpu.CompilerParams(
            dimension_semantics=("parallel",),
            vmem_limit_bytes=vmem_limit,
        ),
    )(x_flat, a_h_b, a_wt_b)

    out = out_flat.reshape(B, C, H_t, W_t)
    return out, (x_flat, a_h_b, a_wt_b)


# ----------------------------------------------------------------------------
# Reference (mirrors the kernel's bf16-operand / f32-accumulate dtype path).
# ----------------------------------------------------------------------------
def _round_bf16_np(a: np.ndarray) -> np.ndarray:
    return np.asarray(jnp.asarray(a, dtype=jnp.bfloat16)).astype(np.float32)


def _numpy_reference(x_bf16, a_h_bf16, a_wt_bf16, C, H_in, H_t, W_t):
    x = np.asarray(x_bf16).astype(np.float32)        # (B, C*H_in, W_in)
    a_h = np.asarray(a_h_bf16).astype(np.float32)    # (B, H_t, H_in)
    a_wt = np.asarray(a_wt_bf16).astype(np.float32)  # (B, W_in, W_t)
    B = x.shape[0]
    out = np.zeros((B, C, H_t, W_t), dtype=np.float32)
    for b in range(B):
        t = _round_bf16_np(x[b] @ a_wt[b])           # (C*H_in, W_t)
        for c in range(C):
            out[b, c] = a_h[b] @ t[c * H_in:(c + 1) * H_in, :]
    return out


if __name__ == "__main__":
    key = jax.random.PRNGKey(0)
    B, C, H_in, W_in = 2, 4, 20, 24
    image_size = (16, 16)
    x = jax.random.normal(key, (B, C, H_in, W_in), dtype=jnp.float32)

    out, (x_b, a_h_b, a_wt_b) = simclr_augmentation(x, image_size=image_size, seed=0)
    out = jax.block_until_ready(out)

    ref = _numpy_reference(x_b, a_h_b, a_wt_b, C, H_in, image_size[0], image_size[1])
    if not np.allclose(np.asarray(out), ref, rtol=1e-2, atol=1e-2):
        raise AssertionError("Pallas kernel output does not match reference")

    print("KERNEL_OK")
</pallas_src>

<mosaic_0001>
module attributes {stable_mosaic.version = 11 : i64} {
  func.func @_augment_kernel(%arg0: i32, %arg1: memref<1x80x24xbf16, #tpu.memory_space<vmem>>, %arg2: memref<1x16x20xbf16, #tpu.memory_space<vmem>>, %arg3: memref<1x24x16xbf16, #tpu.memory_space<vmem>>, %arg4: memref<1x64x16xf32, #tpu.memory_space<vmem>>) attributes {dimension_semantics = [#tpu.dimension_semantics<parallel>], iteration_bounds = array<i64: 2>, scalar_prefetch = 0 : i64, scratch_operands = 0 : i64, tpu.core_type = #tpu.core_type<tc>, window_params = [{transform_indices = @transform_0, window_bounds = array<i64: 1, 80, 24>}, {transform_indices = @transform_1, window_bounds = array<i64: 1, 16, 20>}, {transform_indices = @transform_2, window_bounds = array<i64: 1, 24, 16>}, {transform_indices = @transform_3, window_bounds = array<i64: 1, 64, 16>}]} {
    %c0 = arith.constant 0 : index
    %c0_0 = arith.constant 0 : index
    %c0_1 = arith.constant 0 : index
    %0 = vector.load %arg1[%c0, %c0_0, %c0_1] : memref<1x80x24xbf16, #tpu.memory_space<vmem>>, vector<1x80x24xbf16>
    %1 = vector.shape_cast %0 : vector<1x80x24xbf16> to vector<80x24xbf16>
    %c0_2 = arith.constant 0 : index
    %c0_3 = arith.constant 0 : index
    %c0_4 = arith.constant 0 : index
    %2 = vector.load %arg2[%c0_2, %c0_3, %c0_4] : memref<1x16x20xbf16, #tpu.memory_space<vmem>>, vector<1x16x20xbf16>
    %3 = vector.shape_cast %2 : vector<1x16x20xbf16> to vector<16x20xbf16>
    %c0_5 = arith.constant 0 : index
    %c0_6 = arith.constant 0 : index
    %c0_7 = arith.constant 0 : index
    %4 = vector.load %arg3[%c0_5, %c0_6, %c0_7] : memref<1x24x16xbf16, #tpu.memory_space<vmem>>, vector<1x24x16xbf16>
    %5 = vector.shape_cast %4 : vector<1x24x16xbf16> to vector<24x16xbf16>
    %cst = arith.constant dense<0.000000e+00> : vector<80x16xf32>
    %6 = tpu.matmul %1, %5, %cst {dimension_numbers = #tpu.dot_dimension_numbers<[1], [0], [0], [1], [0, 0, 1, 1], [], []>} : vector<80x24xbf16>, vector<24x16xbf16>, vector<80x16xf32> -> vector<80x16xf32>
    %7 = arith.truncf %6 : vector<80x16xf32> to vector<80x16xbf16>
    %8 = vector.extract_strided_slice %7 {offsets = [0, 0], sizes = [20, 16], strides = [1, 1]} : vector<80x16xbf16> to vector<20x16xbf16>
    %cst_8 = arith.constant dense<0.000000e+00> : vector<16x16xf32>
    %9 = tpu.matmul %3, %8, %cst_8 {dimension_numbers = #tpu.dot_dimension_numbers<[1], [0], [0], [1], [0, 0, 1, 1], [], []>} : vector<16x20xbf16>, vector<20x16xbf16>, vector<16x16xf32> -> vector<16x16xf32>
    %c0_9 = arith.constant 0 : index
    %c0_10 = arith.constant 0 : index
    %c0_11 = arith.constant 0 : index
    %10 = vector.load %arg4[%c0_9, %c0_10, %c0_11] : memref<1x64x16xf32, #tpu.memory_space<vmem>>, vector<1x16x16xf32>
    %11 = vector.shape_cast %10 : vector<1x16x16xf32> to vector<16x16xf32>
    %12 = vector.shape_cast %9 : vector<16x16xf32> to vector<1x16x16xf32>
    tpu.vector_store %arg4[%c0_9, %c0_10, %c0_11], %12 {strides = array<i32>} : memref<1x64x16xf32, #tpu.memory_space<vmem>>, vector<1x16x16xf32>,
    %13 = vector.extract_strided_slice %7 {offsets = [20, 0], sizes = [20, 16], strides = [1, 1]} : vector<80x16xbf16> to vector<20x16xbf16>
    %cst_12 = arith.constant dense<0.000000e+00> : vector<16x16xf32>
    %14 = tpu.matmul %3, %13, %cst_12 {dimension_numbers = #tpu.dot_dimension_numbers<[1], [0], [0], [1], [0, 0, 1, 1], [], []>} : vector<16x20xbf16>, vector<20x16xbf16>, vector<16x16xf32> -> vector<16x16xf32>
    %c0_13 = arith.constant 0 : index
    %c16 = arith.constant 16 : index
    %c0_14 = arith.constant 0 : index
    %15 = vector.load %arg4[%c0_13, %c16, %c0_14] : memref<1x64x16xf32, #tpu.memory_space<vmem>>, vector<1x16x16xf32>
    %16 = vector.shape_cast %15 : vector<1x16x16xf32> to vector<16x16xf32>
    %17 = vector.shape_cast %14 : vector<16x16xf32> to vector<1x16x16xf32>
    tpu.vector_store %arg4[%c0_13, %c16, %c0_14], %17 {strides = array<i32>} : memref<1x64x16xf32, #tpu.memory_space<vmem>>, vector<1x16x16xf32>,
    %18 = vector.extract_strided_slice %7 {offsets = [40, 0], sizes = [20, 16], strides = [1, 1]} : vector<80x16xbf16> to vector<20x16xbf16>
    %cst_15 = arith.constant dense<0.000000e+00> : vector<16x16xf32>
    %19 = tpu.matmul %3, %18, %cst_15 {dimension_numbers = #tpu.dot_dimension_numbers<[1], [0], [0], [1], [0, 0, 1, 1], [], []>} : vector<16x20xbf16>, vector<20x16xbf16>, vector<16x16xf32> -> vector<16x16xf32>
    %c0_16 = arith.constant 0 : index
    %c32 = arith.constant 32 : index
    %c0_17 = arith.constant 0 : index
    %20 = vector.load %arg4[%c0_16, %c32, %c0_17] : memref<1x64x16xf32, #tpu.memory_space<vmem>>, vector<1x16x16xf32>
    %21 = vector.shape_cast %20 : vector<1x16x16xf32> to vector<16x16xf32>
    %22 = vector.shape_cast %19 : vector<16x16xf32> to vector<1x16x16xf32>
    tpu.vector_store %arg4[%c0_16, %c32, %c0_17], %22 {strides = array<i32>} : memref<1x64x16xf32, #tpu.memory_space<vmem>>, vector<1x16x16xf32>,
    %23 = vector.extract_strided_slice %7 {offsets = [60, 0], sizes = [20, 16], strides = [1, 1]} : vector<80x16xbf16> to vector<20x16xbf16>
    %cst_18 = arith.constant dense<0.000000e+00> : vector<16x16xf32>
    %24 = tpu.matmul %3, %23, %cst_18 {dimension_numbers = #tpu.dot_dimension_numbers<[1], [0], [0], [1], [0, 0, 1, 1], [], []>} : vector<16x20xbf16>, vector<20x16xbf16>, vector<16x16xf32> -> vector<16x16xf32>
    %c0_19 = arith.constant 0 : index
    %c48 = arith.constant 48 : index
    %c0_20 = arith.constant 0 : index
    %25 = vector.load %arg4[%c0_19, %c48, %c0_20] : memref<1x64x16xf32, #tpu.memory_space<vmem>>, vector<1x16x16xf32>
    %26 = vector.shape_cast %25 : vector<1x16x16xf32> to vector<16x16xf32>
    %27 = vector.shape_cast %24 : vector<16x16xf32> to vector<1x16x16xf32>
    tpu.vector_store %arg4[%c0_19, %c48, %c0_20], %27 {strides = array<i32>} : memref<1x64x16xf32, #tpu.memory_space<vmem>>, vector<1x16x16xf32>,
    return
  }
  func.func @transform_0(%arg0: i32) -> (i32, i32, i32) {
    %c0_i32 = arith.constant 0 : i32
    %c0_i32_0 = arith.constant 0 : i32
    %c0_i32_1 = arith.constant 0 : i32
    return %arg0, %c0_i32, %c0_i32_0 : i32, i32, i32
  }
  func.func @transform_1(%arg0: i32) -> (i32, i32, i32) {
    %c0_i32 = arith.constant 0 : i32
    %c0_i32_0 = arith.constant 0 : i32
    %c0_i32_1 = arith.constant 0 : i32
    return %arg0, %c0_i32, %c0_i32_0 : i32, i32, i32
  }
  func.func @transform_2(%arg0: i32) -> (i32, i32, i32) {
    %c0_i32 = arith.constant 0 : i32
    %c0_i32_0 = arith.constant 0 : i32
    %c0_i32_1 = arith.constant 0 : i32
    return %arg0, %c0_i32, %c0_i32_0 : i32, i32, i32
  }
  func.func @transform_3(%arg0: i32) -> (i32, i32, i32) {
    %c0_i32 = arith.constant 0 : i32
    %c0_i32_0 = arith.constant 0 : i32
    %c0_i32_1 = arith.constant 0 : i32
    return %arg0, %c0_i32, %c0_i32_0 : i32, i32, i32
  }
}

</mosaic_0001>

<llo_original>
// kernel: tpu_custom_call.1
$region0: #{tpu_custom_call.1}
  #allocation0 [shape = 'u32[]', space=smem, size = 0x4, offset = 0x4, fixed_abs, tag = 'smem constant byte address 0x4 - core index']
  #allocation1 [shape = 'u32[144,128]{1,0:T(1,128)}', space=vmem, size = 0x12000, scoped, tag = 'internal scratch']
  %s0 = inlined_call_operand.vmem [shape: bf16[2,80,24], index: 0, kind: input, shape index: {}]
  %s1 = inlined_call_operand.vmem [shape: bf16[2,16,20], index: 1, kind: input, shape index: {}]
  %s2 = inlined_call_operand.vmem [shape: bf16[2,24,16], index: 2, kind: input, shape index: {}]
  %s3 = inlined_call_operand.vmem [shape: f32[2,64,16], index: 3, kind: output, shape index: {}]
  %s4 = sld [smem:[#allocation0]]
  $region45: #{tpu_custom_call.1} parent=0
    _
  %s6 = ssub.s32 1, %s4
  %s7 = scalar_select 0, %s6, %s4
  loop: start=0, step=1, limit=4
  $region2: #{tpu_custom_call.1} parent=0 // loop_pre_header
    _
  $region3: #{tpu_custom_call.1} parent=0 // loop_header
    %s9 = sphi 0, %s13
    %p10 = scmp.ge.s32.totalorder %s9, 4
    %s19 = sphi 0, %s21
    %s22 = sphi 0, %s19
    %s23 = sphi 0, %s22
    %s39 = sphi 0, %s23
    %s45 = sphi 0, %s47
    %s48 = sphi 0, %s45
    %s49 = sphi 0, %s48
    %s65 = sphi 0, %s49
    %s71 = sphi 0, %s73
    %s74 = sphi 0, %s71
    %s75 = sphi 0, %s74
    %s91 = sphi 0, %s75
    %s97 = sphi 0, %s99
    %s100 = sphi 0, %s97
    %s101 = sphi 0, %s100
    %s117 = sphi 0, %s101
  $region4: #{tpu_custom_call.1} parent=0 // loop_header_branch
    %12 = sbr.rel (%p10) target = $region8
  $region5: #{tpu_custom_call.1} parent=0 // loop_body
    %s14 = ssub.s32 %s9, 1
    %s15 = ssub.s32 %s9, 2
    %s16 = sadd.s32 %s9, 1
    %s17 = ssub.s32 %s9, %s16
    %p18 = scmp.eq.s32.totalorder %s17, 0
    %s20 = sadd.s32 %s19, 1
    %s21 = scalar_select %p18, %s19, %s20
    %p24 = pneg %p18
    %p25 = scmp.eq.s32.totalorder %s9, 1
    %p26 = por %p24, %p25
    %p27 = scmp.ne.s32.totalorder %s19, %s22
    %p28 = scmp.eq.s32.totalorder %s9, 0
    %p29 = por %p27, %p28
    %p30 = scmp.ne.s32.totalorder %s19, %s22
    %p31 = scmp.eq.s32.totalorder %s14, 1
    %p32 = por %p30, %p31
    %p33 = scmp.ne.s32.totalorder %s22, %s23
    %p34 = scmp.eq.s32.totalorder %s14, 0
    %p35 = por %p33, %p34
    %p36 = scmp.ne.s32.totalorder %s22, %s23
    %p37 = scmp.eq.s32.totalorder %s15, 1
    %p38 = por %p36, %p37
    %p40 = scmp.ne.s32.totalorder %s23, %s39
    %p41 = scmp.eq.s32.totalorder %s15, 0
    %p42 = por %p40, %p41
    %s43 = ssub.s32 %s9, %s16
    %p44 = scmp.eq.s32.totalorder %s43, 0
    %s46 = sadd.s32 %s45, 1
    %s47 = scalar_select %p44, %s45, %s46
    %p50 = pneg %p44
    %p51 = scmp.eq.s32.totalorder %s9, 1
    %p52 = por %p50, %p51
    %p53 = scmp.ne.s32.totalorder %s45, %s48
    %p54 = scmp.eq.s32.totalorder %s9, 0
    %p55 = por %p53, %p54
    %p56 = scmp.ne.s32.totalorder %s45, %s48
    %p57 = scmp.eq.s32.totalorder %s14, 1
    %p58 = por %p56, %p57
    %p59 = scmp.ne.s32.totalorder %s48, %s49
    %p60 = scmp.eq.s32.totalorder %s14, 0
    %p61 = por %p59, %p60
    %p62 = scmp.ne.s32.totalorder %s48, %s49
    %p63 = scmp.eq.s32.totalorder %s15, 1
    %p64 = por %p62, %p63
    %p66 = scmp.ne.s32.totalorder %s49, %s65
    %p67 = scmp.eq.s32.totalorder %s15, 0
    %p68 = por %p66, %p67
    %s69 = ssub.s32 %s9, %s16
    %p70 = scmp.eq.s32.totalorder %s69, 0
    %s72 = sadd.s32 %s71, 1
    %s73 = scalar_select %p70, %s71, %s72
    %p76 = pneg %p70
    %p77 = scmp.eq.s32.totalorder %s9, 1
    %p78 = por %p76, %p77
    %p79 = scmp.ne.s32.totalorder %s71, %s74
    %p80 = scmp.eq.s32.totalorder %s9, 0
    %p81 = por %p79, %p80
    %p82 = scmp.ne.s32.totalorder %s71, %s74
    %p83 = scmp.eq.s32.totalorder %s14, 1
    %p84 = por %p82, %p83
    %p85 = scmp.ne.s32.totalorder %s74, %s75
    %p86 = scmp.eq.s32.totalorder %s14, 0
    %p87 = por %p85, %p86
    %p88 = scmp.ne.s32.totalorder %s74, %s75
    %p89 = scmp.eq.s32.totalorder %s15, 1
    %p90 = por %p88, %p89
    %p92 = scmp.ne.s32.totalorder %s75, %s91
    %p93 = scmp.eq.s32.totalorder %s15, 0
    %p94 = por %p92, %p93
    %s95 = ssub.s32 %s9, %s16
    %p96 = scmp.eq.s32.totalorder %s95, 0
    %s98 = sadd.s32 %s97, 1
    %s99 = scalar_select %p96, %s97, %s98
    %p102 = pneg %p96
    %p103 = scmp.eq.s32.totalorder %s9, 1
    %p104 = por %p102, %p103
    %p105 = scmp.ne.s32.totalorder %s97, %s100
    %p106 = scmp.eq.s32.totalorder %s9, 0
    %p107 = por %p105, %p106
    %p108 = scmp.ne.s32.totalorder %s97, %s100
    %p109 = scmp.eq.s32.totalorder %s14, 1
    %p110 = por %p108, %p109
    %p111 = scmp.ne.s32.totalorder %s100, %s101
    %p112 = scmp.eq.s32.totalorder %s14, 0
    %p113 = por %p111, %p112
    %p114 = scmp.ne.s32.totalorder %s100, %s101
    %p115 = scmp.eq.s32.totalorder %s15, 1
    %p116 = por %p114, %p115
    %p118 = scmp.ne.s32.totalorder %s101, %s117
    %p119 = scmp.eq.s32.totalorder %s15, 0
    %p120 = por %p118, %p119
    %p121 = scmp.le.s32.totalorder 1, %s9
    %p122 = scmp.lt.s32.totalorder %s9, 3
    %p123 = pnand %p121, %p122
    %p124 = pneg %p123
    // Predicated region
    $region9: #{tpu_custom_call.1} parent=5 // pred_check
      _
    $region10: #{tpu_custom_call.1} parent=5 // pred_check_branch
      %126 = sbr.rel (%p123) target = $region12
    $region11: #{tpu_custom_call.1} parent=5 // pred_region
      %s127 = ssub.s32 %s9, 1
    $region12: #{tpu_custom_call.1} parent=5 // pred_fallthru
      _
    %p128 = scmp.lt.s32.totalorder %s9, 2
    // Predicated region
    $region13: #{tpu_custom_call.1} parent=5 // pred_check
      %p129 = pneg %p128
    $region14: #{tpu_custom_call.1} parent=5 // pred_check_branch
      %131 = sbr.rel (%p129) target = $region16
    $region15: #{tpu_custom_call.1} parent=5 // pred_region
      // Predicated region
      $region17: #{tpu_custom_call.1} parent=15 // pred_check
        %p132 = pneg %p29
      $region18: #{tpu_custom_call.1} parent=15 // pred_check_branch
        %134 = sbr.rel (%p132) target = $region20
      $region19: #{tpu_custom_call.1} parent=15 // pred_region
        %p135 = scmp.lt.s32.totalorder %s9, 1
        %s136 = scalar_select %p135, %s9, 1
        %s137 = smul.addr %s136, 10
        %s138 = smul.addr %s137, 4
        %s139 = scalar_lea.vmem %s0, %s138
      $region20: #{tpu_custom_call.1} parent=15 // pred_fallthru
        _
      // Predicated region
      $region21: #{tpu_custom_call.1} parent=15 // pred_check
        %p140 = pneg %p55
      $region22: #{tpu_custom_call.1} parent=15 // pred_check_branch
        %142 = sbr.rel (%p140) target = $region24
      $region23: #{tpu_custom_call.1} parent=15 // pred_region
        %p143 = scmp.lt.s32.totalorder %s9, 1
        %s144 = scalar_select %p143, %s9, 1
        %s145 = smul.addr %s144, 2
        %s146 = smul.addr %s145, 4
        %s147 = scalar_lea.vmem %s1, %s146
      $region24: #{tpu_custom_call.1} parent=15 // pred_fallthru
        _
      // Predicated region
      $region25: #{tpu_custom_call.1} parent=15 // pred_check
        %p148 = pneg %p81
      $region26: #{tpu_custom_call.1} parent=15 // pred_check_branch
        %150 = sbr.rel (%p148) target = $region28
      $region27: #{tpu_custom_call.1} parent=15 // pred_region
        %p151 = scmp.lt.s32.totalorder %s9, 1
        %s152 = scalar_select %p151, %s9, 1
        %s153 = smul.addr %s152, 3
        %s154 = smul.addr %s153, 4
        %s155 = scalar_lea.vmem %s2, %s154
      $region28: #{tpu_custom_call.1} parent=15 // pred_fallthru
        _
    $region16: #{tpu_custom_call.1} parent=5 // pred_fallthru
      _
    %p156 = scmp.le.s32.totalorder 1, %s9
    %p157 = scmp.lt.s32.totalorder %s9, 3
    %p158 = pnand %p156, %p157
    %p159 = pneg %p158
    // Predicated region
    $region29: #{tpu_custom_call.1} parent=5 // pred_check
      _
    $region30: #{tpu_custom_call.1} parent=5 // pred_check_branch
      %161 = sbr.rel (%p158) target = $region32
    $region31: #{tpu_custom_call.1} parent=5 // pred_region
      %s162 = ssub.s32 %s9, 1
      %p163 = scmp.lt.s32.totalorder %s14, 1
      %s164 = scalar_select %p163, %s14, 1
      %s165 = smul.addr %s164, 10
      %s166 = smul.addr %s165, 4
      %s167 = scalar_lea.vmem %s0, %s166
      %p168 = pneg %p35
      %p169 = pneg %p32
      %p170 = scmp.lt.s32.totalorder %s14, 1
      %s171 = scalar_select %p170, %s14, 1
      %s172 = smul.addr %s171, 2
      %s173 = smul.addr %s172, 4
      %s174 = scalar_lea.vmem %s1, %s173
      %p175 = pneg %p61
      %p176 = pneg %p58
      %p177 = scmp.lt.s32.totalorder %s14, 1
      %s178 = scalar_select %p177, %s14, 1
      %s179 = smul.addr %s178, 3
      %s180 = smul.addr %s179, 4
      %s181 = scalar_lea.vmem %s2, %s180
      %p182 = pneg %p87
      %p183 = pneg %p84
      %p184 = pneg %p113
      %p185 = pneg %p110
      %p186 = scmp.lt.s32.totalorder %s14, 1
      %s187 = scalar_select %p186, %s14, 1
      %s188 = smul.addr %s187, 8
      %s189 = smul.addr %s188, 8
      %s190 = scalar_lea.vmem %s3, %s189
      %p191 = scmp.lt.s32.totalorder %s14, 1
      %s192 = scalar_select %p191, %s14, 1
      %s193 = smul.addr %s192, 10
      %s194 = smul.addr %s193, 4
      %s195 = scalar_lea.vmem %s0, %s194
      %p196 = scmp.lt.s32.totalorder %s14, 1
      %s197 = scalar_select %p196, %s14, 1
      %s198 = smul.addr %s197, 2
      %s199 = smul.addr %s198, 4
      %s200 = scalar_lea.vmem %s1, %s199
      %p201 = scmp.lt.s32.totalorder %s14, 1
      %s202 = scalar_select %p201, %s14, 1
      %s203 = smul.addr %s202, 3
      %s204 = smul.addr %s203, 4
      %s205 = scalar_lea.vmem %s2, %s204
      %p206 = scmp.lt.s32.totalorder %s14, 1
      %s207 = scalar_select %p206, %s14, 1
      %s208 = smul.addr %s207, 8
      %s209 = smul.addr %s208, 8
      %s210 = scalar_lea.vmem %s3, %s209
      %v212 = vld [vmem:[%s195] sm:$0xf]
      %v213 = vld [vmem:[%s195 + $0x4] sm:$0xf]
      %v214 = vld [vmem:[%s195 + $0x8] sm:$0xf]
      %v215 = vld [vmem:[%s195 + $0xc] sm:$0xf]
      %v216 = vld [vmem:[%s195 + $0x10] sm:$0xf]
      %v217 = vld [vmem:[%s195 + $0x14] sm:$0xf]
      %v218 = vld [vmem:[%s195 + $0x18] sm:$0xf]
      %v219 = vld [vmem:[%s195 + $0x1c] sm:$0xf]
      %v220 = vld [vmem:[%s195 + $0x20] sm:$0xf]
      %v221 = vld [vmem:[%s195 + $0x24] sm:$0xf]
      %v222 = vld [vmem:[%s200] sm:$0xf]
      %v223 = vld [vmem:[%s200 + $0x4] sm:$0xf]
      %v224 = vld [vmem:[%s205] sm:$0xf]
      %v225 = vld [vmem:[%s205 + $0x4] sm:$0xf]
      %v226 = vld [vmem:[%s205 + $0x8] sm:$0xf]
      %v237 = vunpack.c.l.b16 %v212
      %v238 = vunpack.c.l.b16 %v213
      %v239 = vunpack.c.l.b16 %v214
      %v240 = vunpack.c.l.b16 %v215
      %v241 = vunpack.c.l.b16 %v216
      %v242 = vunpack.c.l.b16 %v217
      %v243 = vunpack.c.l.b16 %v218
      %v244 = vunpack.c.l.b16 %v219
      %v245 = vunpack.c.l.b16 %v220
      %v246 = vunpack.c.l.b16 %v221
      %v247 = vpack.c.b16 %v238, %v237
      %v248 = vpack.c.b16 %v240, %v239
      %v249 = vpack.c.b16 %v242, %v241
      %v250 = vpack.c.b16 %v244, %v243
      %v251 = vpack.c.b16 %v246, %v245
      %v255 = vunpack.c.l.b16 %v224
      %v256 = vunpack.c.l.b16 %v225
      %v257 = vunpack.c.l.b16 %v226
      %v258 = vpack.c.b16 %v256, %v255
      %v259 = vpack.c.b16 %v257, %v257
      %vm261 = vcmask 195584
      %v263 = vsel %vm261, %v247, 0
      %v266 = vsel %vm261, %v248, 0
      %v269 = vsel %vm261, %v249, 0
      %v272 = vsel %vm261, %v250, 0
      %v275 = vsel %vm261, %v251, 0
      %vm277 = vcmask 1043456
      %v279 = vsel %vm277, %v259, 0
      %281 = vmatprep.subr.bf16.mxu0 0
      %282 = vmatpush1.bf16.msra.mxu0 %v258
      %283 = vmatprep.subr.bf16.mxu0 0
      %284 = vmatpush1.bf16.msra.mxu0 %v279
      %285 = vmatprep.subr.bf16.mxu0 0
      %286 = vmatpush1.bf16.msra.mxu0 0
      %287 = vmatprep.subr.bf16.mxu0 0
      %288 = vmatpush1.bf16.msra.mxu0 0
      %289 = vmatprep.subr.bf16.mxu0 0
      %290 = vmatpush1.bf16.msra.mxu0 0
      %291 = vmatprep.subr.bf16.mxu0 0
      %292 = vmatpush1.bf16.msra.mxu0 0
      %293 = vmatprep.subr.bf16.mxu0 0
      %294 = vmatpush1.bf16.msra.mxu0 0
      %295 = vmatprep.subr.bf16.mxu0 0
      %296 = vmatpush1.bf16.msra.mxu0 0
      %297 = vmatprep.subr.bf16.mxu0 0
      %298 = vmatpush1.bf16.msra.mxu0 0
      %299 = vmatprep.subr.bf16.mxu0 0
      %300 = vmatpush1.bf16.msra.mxu0 0
      %301 = vmatprep.subr.bf16.mxu0 0
      %302 = vmatpush1.bf16.msra.mxu0 0
      %303 = vmatprep.subr.bf16.mxu0 0
      %304 = vmatpush1.bf16.msra.mxu0 0
      %305 = vmatprep.subr.bf16.mxu0 0
      %306 = vmatpush1.bf16.msra.mxu0 0
      %307 = vmatprep.subr.bf16.mxu0 0
      %308 = vmatpush1.bf16.msra.mxu0 0
      %309 = vmatprep.subr.bf16.mxu0 0
      %310 = vmatpush1.bf16.msra.mxu0 0
      %311 = vmatprep.subr.bf16.mxu0 0
      %312 = vmatpush1.bf16.msra.mxu0 0
      %313 = vmatprep.mubr.bf16.mxu0 0
      %314 = vmatmul.mubr.bf16.gmra.mrb[0].mxu0 %v263
      %v315 = vpop.f32.mrb[0].mxu0
      %v316 = vadd.f32 0.0, %v315
      %v317 = vpop.f32.mrb[0].mxu0
      %v318 = vpop.f32.mrb[0].mxu0
      %v319 = vadd.f32 0.0, %v318
      %v320 = vpop.f32.mrb[0].mxu0
      %321 = vmatprep.mubr.bf16.mxu0 0
      %322 = vmatmul.mubr.bf16.gmra.mrb[0].mxu0 %v266
      %v323 = vpop.f32.mrb[0].mxu0
      %v324 = vadd.f32 0.0, %v323
      %v325 = vpop.f32.mrb[0].mxu0
      %v326 = vpop.f32.mrb[0].mxu0
      %v327 = vadd.f32 0.0, %v326
      %v328 = vpop.f32.mrb[0].mxu0
      %329 = vmatprep.mubr.bf16.mxu0 0
      %330 = vmatmul.mubr.bf16.gmra.mrb[0].mxu0 %v269
      %v331 = vpop.f32.mrb[0].mxu0
      %v332 = vadd.f32 0.0, %v331
      %v333 = vpop.f32.mrb[0].mxu0
      %v334 = vpop.f32.mrb[0].mxu0
      %v335 = vadd.f32 0.0, %v334
      %v336 = vpop.f32.mrb[0].mxu0
      %337 = vmatprep.mubr.bf16.mxu0 0
      %338 = vmatmul.mubr.bf16.gmra.mrb[0].mxu0 %v272
      %v339 = vpop.f32.mrb[0].mxu0
      %v340 = vadd.f32 0.0, %v339
      %v341 = vpop.f32.mrb[0].mxu0
      %v342 = vpop.f32.mrb[0].mxu0
      %v343 = vadd.f32 0.0, %v342
      %v344 = vpop.f32.mrb[0].mxu0
      %345 = vmatprep.mubr.bf16.mxu0 0
      %346 = vmatmul.mubr.bf16.gmra.mrb[0].mxu0 %v275
      %v347 = vpop.f32.mrb[0].mxu0
      %v348 = vadd.f32 0.0, %v347
      %v349 = vpop.f32.mrb[0].mxu0
      %v350 = vpop.f32.mrb[0].mxu0
      %v351 = vadd.f32 0.0, %v350
      %v352 = vpop.f32.mrb[0].mxu0
      %353 = vdwg.mxu0
      %v354 = vpack.c.bf16 %v319, %v316
      %v355 = vpack.c.bf16 %v327, %v324
      %v356 = vpack.c.bf16 %v335, %v332
      %v357 = vpack.c.bf16 %v343, %v340
      %v358 = vpack.c.bf16 %v351, %v348
      %v361 = vunpack.c.l.b16 %v222
      %v362 = vunpack.c.l.b16 %v223
      %v363 = vpack.c.b16 %v362, %v361
      %vm364 = vcmask 162816
      %v366 = vsel %vm364, %v363, 0
      %vm368 = vcmask 1041408
      %v370 = vsel %vm368, %v355, 0
      %372 = vmatprep.subr.bf16.mxu0 0
      %373 = vmatpush1.bf16.msra.mxu0 %v354
      %374 = vmatprep.subr.bf16.mxu0 0
      %375 = vmatpush1.bf16.msra.mxu0 %v370
      %376 = vmatprep.subr.bf16.mxu0 0
      %377 = vmatpush1.bf16.msra.mxu0 0
      %378 = vmatprep.subr.bf16.mxu0 0
      %379 = vmatpush1.bf16.msra.mxu0 0
      %380 = vmatprep.subr.bf16.mxu0 0
      %381 = vmatpush1.bf16.msra.mxu0 0
      %382 = vmatprep.subr.bf16.mxu0 0
      %383 = vmatpush1.bf16.msra.mxu0 0
      %384 = vmatprep.subr.bf16.mxu0 0
      %385 = vmatpush1.bf16.msra.mxu0 0
      %386 = vmatprep.subr.bf16.mxu0 0
      %387 = vmatpush1.bf16.msra.mxu0 0
      %388 = vmatprep.subr.bf16.mxu0 0
      %389 = vmatpush1.bf16.msra.mxu0 0
      %390 = vmatprep.subr.bf16.mxu0 0
      %391 = vmatpush1.bf16.msra.mxu0 0
      %392 = vmatprep.subr.bf16.mxu0 0
      %393 = vmatpush1.bf16.msra.mxu0 0
      %394 = vmatprep.subr.bf16.mxu0 0
      %395 = vmatpush1.bf16.msra.mxu0 0
      %396 = vmatprep.subr.bf16.mxu0 0
      %397 = vmatpush1.bf16.msra.mxu0 0
      %398 = vmatprep.subr.bf16.mxu0 0
      %399 = vmatpush1.bf16.msra.mxu0 0
      %400 = vmatprep.subr.bf16.mxu0 0
      %401 = vmatpush1.bf16.msra.mxu0 0
      %402 = vmatprep.subr.bf16.mxu0 0
      %403 = vmatpush1.bf16.msra.mxu0 0
      %404 = vmatprep.mubr.bf16.mxu0 0
      %405 = vmatmul.mubr.bf16.gmra.mrb[0].mxu0 %v366
      %v406 = vpop.f32.mrb[0].mxu0
      %v407 = vadd.f32 0.0, %v406
      %v408 = vpop.f32.mrb[0].mxu0
      %v409 = vpop.f32.mrb[0].mxu0
      %v410 = vadd.f32 0.0, %v409
      %v411 = vpop.f32.mrb[0].mxu0
      %412 = vdwg.mxu0
      %vm413 = vcmask 130048
      %414 = vst.msk [vmem:[%s210] sm:$0xff] %vm413, %v407
      %415 = vst.msk [vmem:[%s210 + $0x8] sm:$0xff] %vm413, %v410
      %vm418 = vcmask 1045504
      %v419 = vrot.slane %v355, 2
      %v420 = vrot.slane %v356, 2
      %v421 = vsel %vm418, %v419, %v420
      %v424 = vsel %vm368, %v420, 0
      %426 = vmatprep.subr.bf16.mxu0 0
      %427 = vmatpush1.bf16.msra.mxu0 %v421
      %428 = vmatprep.subr.bf16.mxu0 0
      %429 = vmatpush1.bf16.msra.mxu0 %v424
      %430 = vmatprep.subr.bf16.mxu0 0
      %431 = vmatpush1.bf16.msra.mxu0 0
      %432 = vmatprep.subr.bf16.mxu0 0
      %433 = vmatpush1.bf16.msra.mxu0 0
      %434 = vmatprep.subr.bf16.mxu0 0
      %435 = vmatpush1.bf16.msra.mxu0 0
      %436 = vmatprep.subr.bf16.mxu0 0
      %437 = vmatpush1.bf16.msra.mxu0 0
      %438 = vmatprep.subr.bf16.mxu0 0
      %439 = vmatpush1.bf16.msra.mxu0 0
      %440 = vmatprep.subr.bf16.mxu0 0
      %441 = vmatpush1.bf16.msra.mxu0 0
      %442 = vmatprep.subr.bf16.mxu0 0
      %443 = vmatpush1.bf16.msra.mxu0 0
      %444 = vmatprep.subr.bf16.mxu0 0
      %445 = vmatpush1.bf16.msra.mxu0 0
      %446 = vmatprep.subr.bf16.mxu0 0
      %447 = vmatpush1.bf16.msra.mxu0 0
      %448 = vmatprep.subr.bf16.mxu0 0
      %449 = vmatpush1.bf16.msra.mxu0 0
      %450 = vmatprep.subr.bf16.mxu0 0
      %451 = vmatpush1.bf16.msra.mxu0 0
      %452 = vmatprep.subr.bf16.mxu0 0
      %453 = vmatpush1.bf16.msra.mxu0 0
      %454 = vmatprep.subr.bf16.mxu0 0
      %455 = vmatpush1.bf16.msra.mxu0 0
      %456 = vmatprep.subr.bf16.mxu0 0
      %457 = vmatpush1.bf16.msra.mxu0 0
      %458 = vmatprep.mubr.bf16.mxu0 0
      %459 = vmatmul.mubr.bf16.gmra.mrb[0].mxu0 %v366
      %v460 = vpop.f32.mrb[0].mxu0
      %v461 = vadd.f32 0.0, %v460
      %v462 = vpop.f32.mrb[0].mxu0
      %v463 = vpop.f32.mrb[0].mxu0
      %v464 = vadd.f32 0.0, %v463
      %v465 = vpop.f32.mrb[0].mxu0
      %466 = vdwg.mxu0
      %467 = vst.msk [vmem:[%s210 + $0x10] sm:$0xff] %vm413, %v461
      %468 = vst.msk [vmem:[%s210 + $0x18] sm:$0xff] %vm413, %v464
      %vm470 = vcmask 1043456
      %v471 = vrot.slane %v356, 4
      %v472 = vrot.slane %v357, 4
      %v473 = vsel %vm470, %v471, %v472
      %v476 = vsel %vm368, %v472, 0
      %478 = vmatprep.subr.bf16.mxu0 0
      %479 = vmatpush1.bf16.msra.mxu0 %v473
      %480 = vmatprep.subr.bf16.mxu0 0
      %481 = vmatpush1.bf16.msra.mxu0 %v476
      %482 = vmatprep.subr.bf16.mxu0 0
      %483 = vmatpush1.bf16.msra.mxu0 0
      %484 = vmatprep.subr.bf16.mxu0 0
      %485 = vmatpush1.bf16.msra.mxu0 0
      %486 = vmatprep.subr.bf16.mxu0 0
      %487 = vmatpush1.bf16.msra.mxu0 0
      %488 = vmatprep.subr.bf16.mxu0 0
      %489 = vmatpush1.bf16.msra.mxu0 0
      %490 = vmatprep.subr.bf16.mxu0 0
      %491 = vmatpush1.bf16.msra.mxu0 0
      %492 = vmatprep.subr.bf16.mxu0 0
      %493 = vmatpush1.bf16.msra.mxu0 0
      %494 = vmatprep.subr.bf16.mxu0 0
      %495 = vmatpush1.bf16.msra.mxu0 0
      %496 = vmatprep.subr.bf16.mxu0 0
      %497 = vmatpush1.bf16.msra.mxu0 0
      %498 = vmatprep.subr.bf16.mxu0 0
      %499 = vmatpush1.bf16.msra.mxu0 0
      %500 = vmatprep.subr.bf16.mxu0 0
      %501 = vmatpush1.bf16.msra.mxu0 0
      %502 = vmatprep.subr.bf16.mxu0 0
      %503 = vmatpush1.bf16.msra.mxu0 0
      %504 = vmatprep.subr.bf16.mxu0 0
      %505 = vmatpush1.bf16.msra.mxu0 0
      %506 = vmatprep.subr.bf16.mxu0 0
      %507 = vmatpush1.bf16.msra.mxu0 0
      %508 = vmatprep.subr.bf16.mxu0 0
      %509 = vmatpush1.bf16.msra.mxu0 0
      %510 = vmatprep.mubr.bf16.mxu0 0
      %511 = vmatmul.mubr.bf16.gmra.mrb[0].mxu0 %v366
      %v512 = vpop.f32.mrb[0].mxu0
      %v513 = vadd.f32 0.0, %v512
      %v514 = vpop.f32.mrb[0].mxu0
      %v515 = vpop.f32.mrb[0].mxu0
      %v516 = vadd.f32 0.0, %v515
      %v517 = vpop.f32.mrb[0].mxu0
      %518 = vdwg.mxu0
      %519 = vst.msk [vmem:[%s210 + $0x20] sm:$0xff] %vm413, %v513
      %520 = vst.msk [vmem:[%s210 + $0x28] sm:$0xff] %vm413, %v516
      %vm522 = vcmask 1041408
      %v523 = vrot.slane %v357, 6
      %v524 = vrot.slane %v358, 6
      %v525 = vsel %vm522, %v523, %v524
      %v528 = vsel %vm368, %v524, 0
      %530 = vmatprep.subr.bf16.mxu0 0
      %531 = vmatpush1.bf16.msra.mxu0 %v525
      %532 = vmatprep.subr.bf16.mxu0 0
      %533 = vmatpush1.bf16.msra.mxu0 %v528
      %534 = vmatprep.subr.bf16.mxu0 0
      %535 = vmatpush1.bf16.msra.mxu0 0
      %536 = vmatprep.subr.bf16.mxu0 0
      %537 = vmatpush1.bf16.msra.mxu0 0
      %538 = vmatprep.subr.bf16.mxu0 0
      %539 = vmatpush1.bf16.msra.mxu0 0
      %540 = vmatprep.subr.bf16.mxu0 0
      %541 = vmatpush1.bf16.msra.mxu0 0
      %542 = vmatprep.subr.bf16.mxu0 0
      %543 = vmatpush1.bf16.msra.mxu0 0
      %544 = vmatprep.subr.bf16.mxu0 0
      %545 = vmatpush1.bf16.msra.mxu0 0
      %546 = vmatprep.subr.bf16.mxu0 0
      %547 = vmatpush1.bf16.msra.mxu0 0
      %548 = vmatprep.subr.bf16.mxu0 0
      %549 = vmatpush1.bf16.msra.mxu0 0
      %550 = vmatprep.subr.bf16.mxu0 0
      %551 = vmatpush1.bf16.msra.mxu0 0
      %552 = vmatprep.subr.bf16.mxu0 0
      %553 = vmatpush1.bf16.msra.mxu0 0
      %554 = vmatprep.subr.bf16.mxu0 0
      %555 = vmatpush1.bf16.msra.mxu0 0
      %556 = vmatprep.subr.bf16.mxu0 0
      %557 = vmatpush1.bf16.msra.mxu0 0
      %558 = vmatprep.subr.bf16.mxu0 0
      %559 = vmatpush1.bf16.msra.mxu0 0
      %560 = vmatprep.subr.bf16.mxu0 0
      %561 = vmatpush1.bf16.msra.mxu0 0
      %562 = vmatprep.mubr.bf16.mxu0 0
      %563 = vmatmul.mubr.bf16.gmra.mrb[0].mxu0 %v366
      %v564 = vpop.f32.mrb[0].mxu0
      %v565 = vadd.f32 0.0, %v564
      %v566 = vpop.f32.mrb[0].mxu0
      %v567 = vpop.f32.mrb[0].mxu0
      %v568 = vadd.f32 0.0, %v567
      %v569 = vpop.f32.mrb[0].mxu0
      %570 = vdwg.mxu0
      %571 = vst.msk [vmem:[%s210 + $0x30] sm:$0xff] %vm413, %v565
      %572 = vst.msk [vmem:[%s210 + $0x38] sm:$0xff] %vm413, %v568
      %p573 = scmp.lt.s32.totalorder %s14, 1
      %s574 = scalar_select %p573, %s14, 1
      %s575 = smul.addr %s574, 8
      %s576 = smul.addr %s575, 8
      %s577 = scalar_lea.vmem %s3, %s576
      // Predicated region
      $region33: #{tpu_custom_call.1} parent=31 // pred_check
        %p578 = pneg %p110
      $region34: #{tpu_custom_call.1} parent=31 // pred_check_branch
        %580 = sbr.rel (%p578) target = $region36
      $region35: #{tpu_custom_call.1} parent=31 // pred_region
        _
      $region36: #{tpu_custom_call.1} parent=31 // pred_fallthru
        _
    $region32: #{tpu_custom_call.1} parent=5 // pred_fallthru
      _
    %p581 = scmp.le.s32.totalorder 2, %s9
    // Predicated region
    $region37: #{tpu_custom_call.1} parent=5 // pred_check
      %p582 = pneg %p581
    $region38: #{tpu_custom_call.1} parent=5 // pred_check_branch
      %584 = sbr.rel (%p582) target = $region40
    $region39: #{tpu_custom_call.1} parent=5 // pred_region
      %s585 = ssub.s32 %s9, 2
      // Predicated region
      $region41: #{tpu_custom_call.1} parent=39 // pred_check
        %p586 = pneg %p116
      $region42: #{tpu_custom_call.1} parent=39 // pred_check_branch
        %588 = sbr.rel (%p586) target = $region44
      $region43: #{tpu_custom_call.1} parent=39 // pred_region
        %p589 = scmp.lt.s32.totalorder %s15, 1
        %s590 = scalar_select %p589, %s15, 1
        %s591 = smul.addr %s590, 8
        %s592 = smul.addr %s591, 8
        %s593 = scalar_lea.vmem %s3, %s592
      $region44: #{tpu_custom_call.1} parent=39 // pred_fallthru
        _
    $region40: #{tpu_custom_call.1} parent=5 // pred_fallthru
      _
  $region6: #{tpu_custom_call.1} parent=0 // loop_footer
    %s13 = sadd.s32 1, %s9
  $region7: #{tpu_custom_call.1} parent=0 // loop_footer_branch
    %8 = sbr.rel target = $region3
  $region8: #{tpu_custom_call.1} parent=0 // loop_exit
    _

</llo_original>
